<compile_context>
chip_gen: v6e
topology: v6e:2x2x1
jax: 0.10.0
libtpu: 0.0.40
codegen_flags: <defaults>
</compile_context>

<pallas_src>
import functools

import jax
import jax.numpy as jnp
from jax.experimental import pallas as pl
from jax.experimental.pallas import tpu as pltpu


def _round_up(x, m=8):
    return ((x + m - 1) // m) * m


def pack_reg_loss_params(w_t, b_t, w_s, b_s, centroids, T):
    """Pack all RegLoss parameters into ONE fp32 buffer (do ONCE, outside the hot loop).

    Layout (cols = 2*k_dim):
      rows [0 : T*te_dim]          tile_T(w_t.T / T)  in cols [0 : k_dim]        (seq-mean folded in)
      rows [T*te_dim : d_act]      w_s.T              in cols [k_dim : 2*k_dim]
      row  [d_act]                 b_t | b_s          (picked up by the ones-columns of x)
      rows [d_act+1 : d_pad]       zeros              (extra ones-columns hit zero rows)
      rows [d_pad : d_pad+2*k_dim] block-diag(centroids.T, centroids.T)  in cols [0 : 2*k]

    WARNING: 1/T is baked into the w_t block — repack if T changes.
    """
    k_dim, te_dim = w_t.shape
    _, se_dim = w_s.shape
    k, _ = centroids.shape

    d_act = T * te_dim + se_dim          # real activation features (te_flat + se)
    d_pad = _round_up(d_act + 1)         # + at least one ones-column, 8-aligned
    cols = max(2 * k_dim, 2 * k)
    rows = d_pad + _round_up(2 * k_dim)

    wt_tiled = jnp.tile(w_t.T.astype(jnp.float32) / T, (T, 1))      # (T*te_dim, k_dim)

    buf = jnp.zeros((rows, cols), jnp.float32)
    buf = buf.at[0:T * te_dim, 0:k_dim].set(wt_tiled)
    buf = buf.at[T * te_dim:d_act, k_dim:2 * k_dim].set(w_s.T.astype(jnp.float32))
    buf = buf.at[d_act, 0:k_dim].set(b_t.reshape(-1).astype(jnp.float32))
    buf = buf.at[d_act, k_dim:2 * k_dim].set(b_s.reshape(-1).astype(jnp.float32))
    off_c = d_pad
    ct = centroids.T.astype(jnp.float32)                            # (k_dim, k)
    buf = buf.at[off_c:off_c + k_dim, 0:k].set(ct)
    buf = buf.at[off_c + k_dim:off_c + 2 * k_dim, k:2 * k].set(ct)

    meta = dict(T=T, te_dim=te_dim, se_dim=se_dim, k=k, k_dim=k_dim,
                d_act=d_act, d_pad=d_pad, off_c=off_c)
    return buf, meta


def _reg_loss_kernel(x_ref, p_ref, o_ref, *, N, k, k_dim, d_pad, off_c):
    two_kd = 2 * k_dim
    two_k = 2 * k

    # Static, 8-aligned slices of the packed parameter buffer.
    w = p_ref[0:d_pad, 0:two_kd]                 # (d_pad, 2*k_dim): fused [wt/T ; ws ; biases]
    cb = p_ref[off_c:off_c + two_kd, 0:two_k]    # (2*k_dim, 2*k):   block-diag centroids.T

    # One MXU call = seq-mean + both first denses + both bias adds; one tanh for both branches.
    h = jnp.tanh(jnp.dot(x_ref[...], w, preferred_element_type=jnp.float32))    # (N, 2*k_dim)
    # One MXU call for both centroid products (block-diagonal), one tanh.
    sim = jnp.tanh(jnp.dot(h, cb, preferred_element_type=jnp.float32))          # (N, 2*k)

    # assign_prob with v = 1:  q = 1/(1 + sim^2);  q^((v+1)/2) == q.
    q = 1.0 / (1.0 + sim * sim)                                                  # (N, 2*k)

    def _branch_target(qb):
        # Row-normalize q and the q^2/colsum step with approx reciprocal (EUP slot is idle),
        # but use an EXACT divide for the final row-normalization that feeds the log.
        qn = qb * pl.reciprocal(jnp.sum(qb, axis=1, keepdims=True), approx=True)
        wgt = (qn * qn) * pl.reciprocal(jnp.sum(qn, axis=0, keepdims=True), approx=True)
        return wgt / jnp.sum(wgt, axis=1, keepdims=True)

    p_t = _branch_target(q[:, 0:k])              # (N, k)
    p_s = _branch_target(q[:, k:two_k])          # (N, k)

    # js_div with nn.KLDivLoss(reduction='batchmean') semantics (divide by N).
    tiny = jnp.float32(1e-30)                    # guard 0 * log(0) -> NaN
    log_m = jnp.log(jnp.maximum((p_t + p_s) * 0.5, tiny))
    kl_t = jnp.sum(p_t * (jnp.log(jnp.maximum(p_t, tiny)) - log_m))
    kl_s = jnp.sum(p_s * (jnp.log(jnp.maximum(p_s, tiny)) - log_m))
    o_ref[0, 0] = (kl_t + kl_s) * (0.5 / N)


def reg_loss(te, se, packed_params, meta):
    """te: (T, N, te_dim) seq-first, se: (N, se_dim), packed_params from pack_reg_loss_params."""
    T, N, te_dim = te.shape
    # 1/T is baked into packed_params; T must match the packing.
    assert T == meta["T"] and te_dim == meta["te_dim"] and se.shape[1] == meta["se_dim"]

    # Host-side layout prep (cheap XLA ops OUTSIDE the kernel): fold seq into the feature
    # axis so the seq-mean becomes part of the first matmul, append se and the ones-columns
    # that realize the bias adds.  The kernel then has exactly 2 input DMAs.
    te_flat = jnp.transpose(te, (1, 0, 2)).reshape(N, T * te_dim).astype(jnp.float32)
    n_ones = meta["d_pad"] - meta["d_act"]
    x = jnp.concatenate(
        [te_flat, se.astype(jnp.float32), jnp.ones((N, n_ones), jnp.float32)], axis=1)

    kernel = functools.partial(
        _reg_loss_kernel, N=N, k=meta["k"], k_dim=meta["k_dim"],
        d_pad=meta["d_pad"], off_c=meta["off_c"])

    cost = pl.CostEstimate(
        flops=2 * N * meta["d_pad"] * 2 * meta["k_dim"]
              + 2 * N * 2 * meta["k_dim"] * 2 * meta["k"]
              + 32 * N * meta["k"],
        transcendentals=N * 2 * meta["k_dim"] + N * 2 * meta["k"] + 3 * N * meta["k"],
        bytes_accessed=x.size * 4 + packed_params.size * 4 + 4)

    out = pl.pallas_call(
        kernel,
        out_shape=jax.ShapeDtypeStruct((1, 1), jnp.float32),
        in_specs=[pl.BlockSpec(memory_space=pltpu.MemorySpace.VMEM)] * 2,
        out_specs=pl.BlockSpec(memory_space=pltpu.MemorySpace.SMEM),
        cost_estimate=cost,
    )(x, packed_params)
    return out[0, 0]


def _reg_loss_reference(te, se, w_t, b_t, w_s, b_s, centroids):
    """Plain-JAX reference of the PyTorch forward, for a sanity check."""
    te_mean = jnp.mean(te, axis=0)

    def assign_prob(sim):
        q = 1.0 / (1.0 + sim ** 2)
        q = q / jnp.sum(q, axis=1, keepdims=True)
        w = q ** 2 / jnp.sum(q, axis=0, keepdims=True)
        return w / jnp.sum(w, axis=1, keepdims=True)

    sim_t = jnp.tanh(jnp.tanh(te_mean @ w_t.T + b_t) @ centroids.T)
    sim_s = jnp.tanh(jnp.tanh(se @ w_s.T + b_s) @ centroids.T)
    p_t = assign_prob(sim_t)
    p_s = assign_prob(sim_s)
    log_m = jnp.log((p_t + p_s) * 0.5)
    n = p_t.shape[0]
    kl = lambda tgt: jnp.sum(tgt * (jnp.log(tgt) - log_m)) / n
    return (kl(p_t) + kl(p_s)) * 0.5


if __name__ == "__main__":
    # Small shapes consistent with the module's forward.
    T, N = 8, 16
    te_dim, se_dim = 32, 24
    k, k_dim = 4, 16

    key = jax.random.PRNGKey(0)
    k_te, k_se, k_wt, k_bt, k_ws, k_bs, k_c = jax.random.split(key, 7)

    te = jax.random.normal(k_te, (T, N, te_dim), dtype=jnp.float32)
    se = jax.random.normal(k_se, (N, se_dim), dtype=jnp.float32)

    # Dense(te_dim -> k_dim) / Dense(se_dim -> k_dim): Linear weights stored (out, in).
    w_t = 0.1 * jax.random.normal(k_wt, (k_dim, te_dim), dtype=jnp.float32)
    b_t = 0.1 * jax.random.normal(k_bt, (1, k_dim), dtype=jnp.float32)
    w_s = 0.1 * jax.random.normal(k_ws, (k_dim, se_dim), dtype=jnp.float32)
    b_s = 0.1 * jax.random.normal(k_bs, (1, k_dim), dtype=jnp.float32)

    # centroids: (k, k_dim), orthogonal init (like nn.init.orthogonal_).
    centroids = jax.nn.initializers.orthogonal()(k_c, (k, k_dim), jnp.float32)

    # One-time parameter packing (outside the hot loop in real training).
    packed, meta = pack_reg_loss_params(w_t, b_t, w_s, b_s, centroids, T)

    loss = reg_loss(te, se, packed, meta)
    jax.block_until_ready(loss)

    ref = _reg_loss_reference(te, se, w_t, b_t, w_s, b_s, centroids)
    jax.block_until_ready(ref)

    assert loss.shape == () and jnp.isfinite(loss)
    # Generous tolerance: approx-reciprocal normalizations change low-order bits only.
    assert jnp.allclose(loss, ref, rtol=1e-2, atol=1e-3), (loss, ref)
    print("KERNEL_OK")
</pallas_src>

<mosaic_0001>
module attributes {stable_mosaic.version = 11 : i64} {
  func.func @_reg_loss_kernel(%arg0: memref<16x288xf32, #tpu.memory_space<vmem>>, %arg1: memref<320x32xf32, #tpu.memory_space<vmem>>, %arg2: memref<1x1xf32, #tpu.memory_space<smem>>) attributes {dimension_semantics = [], scalar_prefetch = 0 : i64, scratch_operands = 0 : i64, tpu.core_type = #tpu.core_type<tc>} {
    %c0 = arith.constant 0 : index
    %c0_0 = arith.constant 0 : index
    %0 = vector.load %arg1[%c0, %c0_0] : memref<320x32xf32, #tpu.memory_space<vmem>>, vector<288x32xf32>
    %c288 = arith.constant 288 : index
    %c0_1 = arith.constant 0 : index
    %1 = vector.load %arg1[%c288, %c0_1] : memref<320x32xf32, #tpu.memory_space<vmem>>, vector<32x8xf32>
    %c0_2 = arith.constant 0 : index
    %c0_3 = arith.constant 0 : index
    %2 = vector.load %arg0[%c0_2, %c0_3] : memref<16x288xf32, #tpu.memory_space<vmem>>, vector<16x288xf32>
    %cst = arith.constant dense<0.000000e+00> : vector<16x32xf32>
    %3 = tpu.matmul %2, %0, %cst {dimension_numbers = #tpu.dot_dimension_numbers<[1], [0], [0], [1], [0, 0, 1, 1], [], []>} : vector<16x288xf32>, vector<288x32xf32>, vector<16x32xf32> -> vector<16x32xf32>
    %4 = math.tanh %3 : vector<16x32xf32>
    %cst_4 = arith.constant dense<0.000000e+00> : vector<16x8xf32>
    %5 = tpu.matmul %4, %1, %cst_4 {dimension_numbers = #tpu.dot_dimension_numbers<[1], [0], [0], [1], [0, 0, 1, 1], [], []>} : vector<16x32xf32>, vector<32x8xf32>, vector<16x8xf32> -> vector<16x8xf32>
    %6 = math.tanh %5 : vector<16x8xf32>
    %7 = arith.mulf %6, %6 : vector<16x8xf32>
    %cst_5 = arith.constant 1.000000e+00 : f32
    %8 = vector.broadcast %cst_5 : f32 to vector<16x8xf32>
    %9 = arith.addf %8, %7 : vector<16x8xf32>
    %cst_6 = arith.constant 1.000000e+00 : f32
    %10 = vector.broadcast %cst_6 : f32 to vector<16x8xf32>
    %11 = arith.divf %10, %9 : vector<16x8xf32>
    %12 = vector.extract_strided_slice %11 {offsets = [0, 0], sizes = [16, 4], strides = [1, 1]} : vector<16x8xf32> to vector<16x4xf32>
    %cst_7 = arith.constant dense<0.000000e+00> : vector<16xf32>
    %13 = vector.multi_reduction <add>, %12, %cst_7 [1] : vector<16x4xf32> to vector<16xf32>
    %14 = vector.shape_cast %13 : vector<16xf32> to vector<16x1xf32>
    %15 = tpu.reciprocal %14 {approx = true} : vector<16x1xf32> -> vector<16x1xf32>
    %16 = vector.broadcast %15 : vector<16x1xf32> to vector<16x4xf32>
    %17 = arith.mulf %12, %16 : vector<16x4xf32>
    %18 = arith.mulf %17, %17 : vector<16x4xf32>
    %cst_8 = arith.constant dense<0.000000e+00> : vector<4xf32>
    %19 = vector.multi_reduction <add>, %17, %cst_8 [0] : vector<16x4xf32> to vector<4xf32>
    %20 = vector.shape_cast %19 : vector<4xf32> to vector<1x4xf32>
    %21 = tpu.reciprocal %20 {approx = true} : vector<1x4xf32> -> vector<1x4xf32>
    %22 = vector.broadcast %21 : vector<1x4xf32> to vector<16x4xf32>
    %23 = arith.mulf %18, %22 : vector<16x4xf32>
    %cst_9 = arith.constant dense<0.000000e+00> : vector<16xf32>
    %24 = vector.multi_reduction <add>, %23, %cst_9 [1] : vector<16x4xf32> to vector<16xf32>
    %25 = vector.shape_cast %24 : vector<16xf32> to vector<16x1xf32>
    %26 = vector.broadcast %25 : vector<16x1xf32> to vector<16x4xf32>
    %27 = arith.divf %23, %26 : vector<16x4xf32>
    %28 = vector.extract_strided_slice %11 {offsets = [0, 4], sizes = [16, 4], strides = [1, 1]} : vector<16x8xf32> to vector<16x4xf32>
    %cst_10 = arith.constant dense<0.000000e+00> : vector<16xf32>
    %29 = vector.multi_reduction <add>, %28, %cst_10 [1] : vector<16x4xf32> to vector<16xf32>
    %30 = vector.shape_cast %29 : vector<16xf32> to vector<16x1xf32>
    %31 = tpu.reciprocal %30 {approx = true} : vector<16x1xf32> -> vector<16x1xf32>
    %32 = vector.broadcast %31 : vector<16x1xf32> to vector<16x4xf32>
    %33 = arith.mulf %28, %32 : vector<16x4xf32>
    %34 = arith.mulf %33, %33 : vector<16x4xf32>
    %cst_11 = arith.constant dense<0.000000e+00> : vector<4xf32>
    %35 = vector.multi_reduction <add>, %33, %cst_11 [0] : vector<16x4xf32> to vector<4xf32>
    %36 = vector.shape_cast %35 : vector<4xf32> to vector<1x4xf32>
    %37 = tpu.reciprocal %36 {approx = true} : vector<1x4xf32> -> vector<1x4xf32>
    %38 = vector.broadcast %37 : vector<1x4xf32> to vector<16x4xf32>
    %39 = arith.mulf %34, %38 : vector<16x4xf32>
    %cst_12 = arith.constant dense<0.000000e+00> : vector<16xf32>
    %40 = vector.multi_reduction <add>, %39, %cst_12 [1] : vector<16x4xf32> to vector<16xf32>
    %41 = vector.shape_cast %40 : vector<16xf32> to vector<16x1xf32>
    %42 = vector.broadcast %41 : vector<16x1xf32> to vector<16x4xf32>
    %43 = arith.divf %39, %42 : vector<16x4xf32>
    %44 = arith.addf %27, %43 : vector<16x4xf32>
    %cst_13 = arith.constant 5.000000e-01 : f32
    %45 = vector.broadcast %cst_13 : f32 to vector<16x4xf32>
    %46 = arith.mulf %44, %45 : vector<16x4xf32>
    %cst_14 = arith.constant 1.000000e-30 : f32
    %47 = vector.broadcast %cst_14 : f32 to vector<16x4xf32>
    %48 = arith.maximumf %46, %47 : vector<16x4xf32>
    %49 = math.log %48 : vector<16x4xf32>
    %cst_15 = arith.constant 1.000000e-30 : f32
    %50 = vector.broadcast %cst_15 : f32 to vector<16x4xf32>
    %51 = arith.maximumf %27, %50 : vector<16x4xf32>
    %52 = math.log %51 : vector<16x4xf32>
    %53 = arith.subf %52, %49 : vector<16x4xf32>
    %54 = arith.mulf %27, %53 : vector<16x4xf32>
    %55 = vector.shape_cast %54 : vector<16x4xf32> to vector<1x16x4xf32>
    %cst_16 = arith.constant dense<0.000000e+00> : vector<1xf32>
    %56 = vector.multi_reduction <add>, %55, %cst_16 [1, 2] : vector<1x16x4xf32> to vector<1xf32>
    %57 = vector.shape_cast %56 : vector<1xf32> to vector<1x1x1xf32>
    %58 = vector.extract %57[0, 0, 0] : f32 from vector<1x1x1xf32>
    %cst_17 = arith.constant 1.000000e-30 : f32
    %59 = vector.broadcast %cst_17 : f32 to vector<16x4xf32>
    %60 = arith.maximumf %43, %59 : vector<16x4xf32>
    %61 = math.log %60 : vector<16x4xf32>
    %62 = arith.subf %61, %49 : vector<16x4xf32>
    %63 = arith.mulf %43, %62 : vector<16x4xf32>
    %64 = vector.shape_cast %63 : vector<16x4xf32> to vector<1x16x4xf32>
    %cst_18 = arith.constant dense<0.000000e+00> : vector<1xf32>
    %65 = vector.multi_reduction <add>, %64, %cst_18 [1, 2] : vector<1x16x4xf32> to vector<1xf32>
    %66 = vector.shape_cast %65 : vector<1xf32> to vector<1x1x1xf32>
    %67 = vector.extract %66[0, 0, 0] : f32 from vector<1x1x1xf32>
    %68 = arith.addf %58, %67 : f32
    %cst_19 = arith.constant 3.125000e-02 : f32
    %69 = arith.mulf %68, %cst_19 : f32
    %c0_20 = arith.constant 0 : index
    %c0_21 = arith.constant 0 : index
    %70 = memref.load %arg2[%c0_20, %c0_21] : memref<1x1xf32, #tpu.memory_space<smem>>
    memref.store %69, %arg2[%c0_20, %c0_21] : memref<1x1xf32, #tpu.memory_space<smem>>
    return
  }
}

</mosaic_0001>

<llo_original>
// kernel: tpu_custom_call.1
$region0: #{tpu_custom_call.1}
  #allocation0 [shape = 'u32[]', space=smem, size = 0x4, offset = 0x4, fixed_abs, tag = 'smem constant byte address 0x4 - core index']
  #allocation1 [shape = 'u32[144,128]{1,0:T(1,128)}', space=vmem, size = 0x12000, scoped, tag = 'internal scratch']
  %s0 = inlined_call_operand.vmem [shape: f32[16,288], index: 0, kind: input, shape index: {}]
  %s1 = inlined_call_operand.vmem [shape: f32[320,32], index: 1, kind: input, shape index: {}]
  %s2 = inlined_call_operand.hbm [shape: f32[1,1], index: 2, kind: output, shape index: {}]
  %s3 = sld [smem:[#allocation0]]
  $region18: #{tpu_custom_call.1} parent=0
    _
  %s5 = ssub.s32 1, %s3
  %s6 = scalar_select 0, %s5, %s3
  $region1: #{tpu_custom_call.1} parent=0
    #allocation2 [shape = 'u8[512]{0}', space=smem, size = 0x200, scoped, tag = 'output window, operand 0, single buffered']
    #allocation3 [shape = 's32[1]{0}', space=sflag, size = 0x4, scoped, tag = 'scoped memory for tpu_custom_call.1']
    %7 = vsyncpa [#allocation3], 0
    // Predicated region
    $region2: #{tpu_custom_call.1} parent=1 // pred_check
      _
    $region3: #{tpu_custom_call.1} parent=1 // pred_check_branch
      %9 = sbr.rel (0) target = $region5
    $region4: #{tpu_custom_call.1} parent=1 // pred_region
      _
    $region5: #{tpu_custom_call.1} parent=1 // pred_fallthru
      _
    // Predicated region
    $region6: #{tpu_custom_call.1} parent=1 // pred_check
      _
    $region7: #{tpu_custom_call.1} parent=1 // pred_check_branch
      %11 = sbr.rel (0) target = $region9
    $region8: #{tpu_custom_call.1} parent=1 // pred_region
      _
    $region9: #{tpu_custom_call.1} parent=1 // pred_fallthru
      _
    %v12 = vld [vmem:[%s1] sm:$0xff]
    %v13 = vld [vmem:[%s1 + $0x8] sm:$0xff]
    %v14 = vld [vmem:[%s1 + $0x10] sm:$0xff]
    %v15 = vld [vmem:[%s1 + $0x18] sm:$0xff]
    %v16 = vld [vmem:[%s1 + $0x20] sm:$0xff]
    %v17 = vld [vmem:[%s1 + $0x28] sm:$0xff]
    %v18 = vld [vmem:[%s1 + $0x30] sm:$0xff]
    %v19 = vld [vmem:[%s1 + $0x38] sm:$0xff]
    %v20 = vld [vmem:[%s1 + $0x40] sm:$0xff]
    %v21 = vld [vmem:[%s1 + $0x48] sm:$0xff]
    %v22 = vld [vmem:[%s1 + $0x50] sm:$0xff]
    %v23 = vld [vmem:[%s1 + $0x58] sm:$0xff]
    %v24 = vld [vmem:[%s1 + $0x60] sm:$0xff]
    %v25 = vld [vmem:[%s1 + $0x68] sm:$0xff]
    %v26 = vld [vmem:[%s1 + $0x70] sm:$0xff]
    %v27 = vld [vmem:[%s1 + $0x78] sm:$0xff]
    %v28 = vld [vmem:[%s1 + $0x80] sm:$0xff]
    %v29 = vld [vmem:[%s1 + $0x88] sm:$0xff]
    %v30 = vld [vmem:[%s1 + $0x90] sm:$0xff]
    %v31 = vld [vmem:[%s1 + $0x98] sm:$0xff]
    %v32 = vld [vmem:[%s1 + $0xa0] sm:$0xff]
    %v33 = vld [vmem:[%s1 + $0xa8] sm:$0xff]
    %v34 = vld [vmem:[%s1 + $0xb0] sm:$0xff]
    %v35 = vld [vmem:[%s1 + $0xb8] sm:$0xff]
    %v36 = vld [vmem:[%s1 + $0xc0] sm:$0xff]
    %v37 = vld [vmem:[%s1 + $0xc8] sm:$0xff]
    %v38 = vld [vmem:[%s1 + $0xd0] sm:$0xff]
    %v39 = vld [vmem:[%s1 + $0xd8] sm:$0xff]
    %v40 = vld [vmem:[%s1 + $0xe0] sm:$0xff]
    %v41 = vld [vmem:[%s1 + $0xe8] sm:$0xff]
    %v42 = vld [vmem:[%s1 + $0xf0] sm:$0xff]
    %v43 = vld [vmem:[%s1 + $0xf8] sm:$0xff]
    %v44 = vld [vmem:[%s1 + $0x100] sm:$0xff]
    %v45 = vld [vmem:[%s1 + $0x108] sm:$0xff]
    %v46 = vld [vmem:[%s1 + $0x110] sm:$0xff]
    %v47 = vld [vmem:[%s1 + $0x118] sm:$0xff]
    %v48 = vld [vmem:[%s1 + $0x120] sm:$0xff]
    %v49 = vld [vmem:[%s1 + $0x128] sm:$0xff]
    %v50 = vld [vmem:[%s1 + $0x130] sm:$0xff]
    %v51 = vld [vmem:[%s1 + $0x138] sm:$0xff]
    %v52 = vld [vmem:[%s0] sm:$0xff]
    %v53 = vld [vmem:[%s0 + $0x8] sm:$0xff]
    %v54 = vld [vmem:[%s0 + $0x10] sm:$0xff]
    %v55 = vld [vmem:[%s0 + $0x18] sm:$0xff]
    %v56 = vld [vmem:[%s0 + $0x20] sm:$0xff]
    %v57 = vld [vmem:[%s0 + $0x28] sm:$0xff]
    %vm58 = vcmask 261120
    %v60 = vsel %vm58, %v54, 0
    %v63 = vsel %vm58, %v57, 0
    %65 = vmatprep.subr.mxu0 0.0
    %66 = vmatpush1.msra.mxu0 %v27
    %67 = vmatprep.subr.mxu0 0.0
    %68 = vmatpush1.msra.mxu0 %v26
    %69 = vmatprep.subr.mxu0 0.0
    %70 = vmatpush1.msra.mxu0 %v25
    %71 = vmatprep.subr.mxu0 0.0
    %72 = vmatpush1.msra.mxu0 %v24
    %73 = vmatprep.subr.mxu0 0.0
    %74 = vmatpush1.msra.mxu0 %v23
    %75 = vmatprep.subr.mxu0 0.0
    %76 = vmatpush1.msra.mxu0 %v22
    %77 = vmatprep.subr.mxu0 0.0
    %78 = vmatpush1.msra.mxu0 %v21
    %79 = vmatprep.subr.mxu0 0.0
    %80 = vmatpush1.msra.mxu0 %v20
    %81 = vmatprep.subr.mxu0 0.0
    %82 = vmatpush1.msra.mxu0 %v19
    %83 = vmatprep.subr.mxu0 0.0
    %84 = vmatpush1.msra.mxu0 %v18
    %85 = vmatprep.subr.mxu0 0.0
    %86 = vmatpush1.msra.mxu0 %v17
    %87 = vmatprep.subr.mxu0 0.0
    %88 = vmatpush1.msra.mxu0 %v16
    %89 = vmatprep.subr.mxu0 0.0
    %90 = vmatpush1.msra.mxu0 %v15
    %91 = vmatprep.subr.mxu0 0.0
    %92 = vmatpush1.msra.mxu0 %v14
    %93 = vmatprep.subr.mxu0 0.0
    %94 = vmatpush1.msra.mxu0 %v13
    %95 = vmatprep.subr.mxu0 0.0
    %96 = vmatpush1.msra.mxu0 %v12
    %97 = vmatprep.subr.mxu0 0.0
    %98 = vmatpush2.msra.mxu0 %v43
    %99 = vmatprep.subr.mxu0 0.0
    %100 = vmatpush2.msra.mxu0 %v42
    %101 = vmatprep.subr.mxu0 0.0
    %102 = vmatpush2.msra.mxu0 %v41
    %103 = vmatprep.subr.mxu0 0.0
    %104 = vmatpush2.msra.mxu0 %v40
    %105 = vmatprep.subr.mxu0 0.0
    %106 = vmatpush2.msra.mxu0 %v39
    %107 = vmatprep.subr.mxu0 0.0
    %108 = vmatpush2.msra.mxu0 %v38
    %109 = vmatprep.subr.mxu0 0.0
    %110 = vmatpush2.msra.mxu0 %v37
    %111 = vmatprep.subr.mxu0 0.0
    %112 = vmatpush2.msra.mxu0 %v36
    %113 = vmatprep.subr.mxu0 0.0
    %114 = vmatpush2.msra.mxu0 %v35
    %115 = vmatprep.subr.mxu0 0.0
    %116 = vmatpush2.msra.mxu0 %v34
    %117 = vmatprep.subr.mxu0 0.0
    %118 = vmatpush2.msra.mxu0 %v33
    %119 = vmatprep.subr.mxu0 0.0
    %120 = vmatpush2.msra.mxu0 %v32
    %121 = vmatprep.subr.mxu0 0.0
    %122 = vmatpush2.msra.mxu0 %v31
    %123 = vmatprep.subr.mxu0 0.0
    %124 = vmatpush2.msra.mxu0 %v30
    %125 = vmatprep.subr.mxu0 0.0
    %126 = vmatpush2.msra.mxu0 %v29
    %127 = vmatprep.subr.mxu0 0.0
    %128 = vmatpush2.msra.mxu0 %v28
    %129 = vmatprep.mubr.f32.mxu0 %v53
    %130 = vmatmul.mubr.f32.gmra.mxu0 %v52
    %v131 = vpop.f32.mrf.mxu0
    %v132 = vadd.f32 0.0, %v131
    %v133 = vpop.f32.mrf.mxu0
    %134 = vmatprep.mubr.f32.mxu0 %v56
    %135 = vmatmul.mubr.f32.gmra.mxu0 %v55
    %v136 = vpop.f32.mrf.mxu0
    %v137 = vadd.f32 0.0, %v136
    %v138 = vpop.f32.mrf.mxu0
    %139 = vdwg.mxu0
    %140 = vmatprep.subr.mxu0 0.0
    %141 = vmatpush1.msra.mxu0 0.0
    %142 = vmatprep.subr.mxu0 0.0
    %143 = vmatpush1.msra.mxu0 0.0
    %144 = vmatprep.subr.mxu0 0.0
    %145 = vmatpush1.msra.mxu0 0.0
    %146 = vmatprep.subr.mxu0 0.0
    %147 = vmatpush1.msra.mxu0 0.0
    %148 = vmatprep.subr.mxu0 0.0
    %149 = vmatpush1.msra.mxu0 0.0
    %150 = vmatprep.subr.mxu0 0.0
    %151 = vmatpush1.msra.mxu0 0.0
    %152 = vmatprep.subr.mxu0 0.0
    %153 = vmatpush1.msra.mxu0 0.0
    %154 = vmatprep.subr.mxu0 0.0
    %155 = vmatpush1.msra.mxu0 0.0
    %156 = vmatprep.subr.mxu0 0.0
    %157 = vmatpush1.msra.mxu0 0.0
    %158 = vmatprep.subr.mxu0 0.0
    %159 = vmatpush1.msra.mxu0 0.0
    %160 = vmatprep.subr.mxu0 0.0
    %161 = vmatpush1.msra.mxu0 0.0
    %162 = vmatprep.subr.mxu0 0.0
    %163 = vmatpush1.msra.mxu0 0.0
    %164 = vmatprep.subr.mxu0 0.0
    %165 = vmatpush1.msra.mxu0 %v47
    %166 = vmatprep.subr.mxu0 0.0
    %167 = vmatpush1.msra.mxu0 %v46
    %168 = vmatprep.subr.mxu0 0.0
    %169 = vmatpush1.msra.mxu0 %v45
    %170 = vmatprep.subr.mxu0 0.0
    %171 = vmatpush1.msra.mxu0 %v44
    %172 = vmatprep.subr.mxu0 0.0
    %173 = vmatpush2.msra.mxu0 0.0
    %174 = vmatprep.subr.mxu0 0.0
    %175 = vmatpush2.msra.mxu0 0.0
    %176 = vmatprep.subr.mxu0 0.0
    %177 = vmatpush2.msra.mxu0 0.0
    %178 = vmatprep.subr.mxu0 0.0
    %179 = vmatpush2.msra.mxu0 0.0
    %180 = vmatprep.subr.mxu0 0.0
    %181 = vmatpush2.msra.mxu0 0.0
    %182 = vmatprep.subr.mxu0 0.0
    %183 = vmatpush2.msra.mxu0 0.0
    %184 = vmatprep.subr.mxu0 0.0
    %185 = vmatpush2.msra.mxu0 0.0
    %186 = vmatprep.subr.mxu0 0.0
    %187 = vmatpush2.msra.mxu0 0.0
    %188 = vmatprep.subr.mxu0 0.0
    %189 = vmatpush2.msra.mxu0 0.0
    %190 = vmatprep.subr.mxu0 0.0
    %191 = vmatpush2.msra.mxu0 0.0
    %192 = vmatprep.subr.mxu0 0.0
    %193 = vmatpush2.msra.mxu0 0.0
    %194 = vmatprep.subr.mxu0 0.0
    %195 = vmatpush2.msra.mxu0 0.0
    %196 = vmatprep.subr.mxu0 0.0
    %197 = vmatpush2.msra.mxu0 0.0
    %198 = vmatprep.subr.mxu0 0.0
    %199 = vmatpush2.msra.mxu0 0.0
    %200 = vmatprep.subr.mxu0 0.0
    %201 = vmatpush2.msra.mxu0 0.0
    %202 = vmatprep.subr.mxu0 0.0
    %203 = vmatpush2.msra.mxu0 0.0
    %204 = vmatprep.mubr.f32.mxu0 0.0
    %205 = vmatmul.mubr.f32.gmra.mxu0 %v60
    %v206 = vpop.f32.mrf.mxu0
    %v207 = vadd.f32 %v132, %v206
    %v208 = vpop.f32.mrf.mxu0
    %209 = vmatprep.mubr.f32.mxu0 0.0
    %210 = vmatmul.mubr.f32.gmra.mxu0 %v63
    %v211 = vpop.f32.mrf.mxu0
    %v212 = vadd.f32 %v137, %v211
    %v213 = vpop.f32.mrf.mxu0
    %214 = vdwg.mxu0
    %v215 = vtanh.pop %v207
    %v216 = vtanh.pop %v212
    %v218 = vsel %vm58, %v215, 0
    %v221 = vsel %vm58, %v216, 0
    %223 = vmatprep.subr.mxu0 0.0
    %224 = vmatpush1.msra.mxu0 0.0
    %225 = vmatprep.subr.mxu0 0.0
    %226 = vmatpush1.msra.mxu0 0.0
    %227 = vmatprep.subr.mxu0 0.0
    %228 = vmatpush1.msra.mxu0 0.0
    %229 = vmatprep.subr.mxu0 0.0
    %230 = vmatpush1.msra.mxu0 0.0
    %231 = vmatprep.subr.mxu0 0.0
    %232 = vmatpush1.msra.mxu0 0.0
    %233 = vmatprep.subr.mxu0 0.0
    %234 = vmatpush1.msra.mxu0 0.0
    %235 = vmatprep.subr.mxu0 0.0
    %236 = vmatpush1.msra.mxu0 0.0
    %237 = vmatprep.subr.mxu0 0.0
    %238 = vmatpush1.msra.mxu0 0.0
    %239 = vmatprep.subr.mxu0 0.0
    %240 = vmatpush1.msra.mxu0 0.0
    %241 = vmatprep.subr.mxu0 0.0
    %242 = vmatpush1.msra.mxu0 0.0
    %243 = vmatprep.subr.mxu0 0.0
    %244 = vmatpush1.msra.mxu0 0.0
    %245 = vmatprep.subr.mxu0 0.0
    %246 = vmatpush1.msra.mxu0 0.0
    %247 = vmatprep.subr.mxu0 0.0
    %248 = vmatpush1.msra.mxu0 %v51
    %249 = vmatprep.subr.mxu0 0.0
    %250 = vmatpush1.msra.mxu0 %v50
    %251 = vmatprep.subr.mxu0 0.0
    %252 = vmatpush1.msra.mxu0 %v49
    %253 = vmatprep.subr.mxu0 0.0
    %254 = vmatpush1.msra.mxu0 %v48
    %255 = vmatprep.subr.mxu0 0.0
    %256 = vmatpush2.msra.mxu0 0.0
    %257 = vmatprep.subr.mxu0 0.0
    %258 = vmatpush2.msra.mxu0 0.0
    %259 = vmatprep.subr.mxu0 0.0
    %260 = vmatpush2.msra.mxu0 0.0
    %261 = vmatprep.subr.mxu0 0.0
    %262 = vmatpush2.msra.mxu0 0.0
    %263 = vmatprep.subr.mxu0 0.0
    %264 = vmatpush2.msra.mxu0 0.0
    %265 = vmatprep.subr.mxu0 0.0
    %266 = vmatpush2.msra.mxu0 0.0
    %267 = vmatprep.subr.mxu0 0.0
    %268 = vmatpush2.msra.mxu0 0.0
    %269 = vmatprep.subr.mxu0 0.0
    %270 = vmatpush2.msra.mxu0 0.0
    %271 = vmatprep.subr.mxu0 0.0
    %272 = vmatpush2.msra.mxu0 0.0
    %273 = vmatprep.subr.mxu0 0.0
    %274 = vmatpush2.msra.mxu0 0.0
    %275 = vmatprep.subr.mxu0 0.0
    %276 = vmatpush2.msra.mxu0 0.0
    %277 = vmatprep.subr.mxu0 0.0
    %278 = vmatpush2.msra.mxu0 0.0
    %279 = vmatprep.subr.mxu0 0.0
    %280 = vmatpush2.msra.mxu0 0.0
    %281 = vmatprep.subr.mxu0 0.0
    %282 = vmatpush2.msra.mxu0 0.0
    %283 = vmatprep.subr.mxu0 0.0
    %284 = vmatpush2.msra.mxu0 0.0
    %285 = vmatprep.subr.mxu0 0.0
    %286 = vmatpush2.msra.mxu0 0.0
    %287 = vmatprep.mubr.f32.mxu0 0.0
    %288 = vmatmul.mubr.f32.gmra.mxu0 %v218
    %v289 = vpop.f32.mrf.mxu0
    %v290 = vadd.f32 0.0, %v289
    %v291 = vpop.f32.mrf.mxu0
    %292 = vmatprep.mubr.f32.mxu0 0.0
    %293 = vmatmul.mubr.f32.gmra.mxu0 %v221
    %v294 = vpop.f32.mrf.mxu0
    %v295 = vadd.f32 0.0, %v294
    %v296 = vpop.f32.mrf.mxu0
    %297 = vdwg.mxu0
    %v298 = vtanh.pop %v290
    %v299 = vtanh.pop %v295
    %v300 = vmul.f32 %v298, %v298
    %v301 = vmul.f32 %v299, %v299
    %v302 = vadd.f32 %v300, 1.0
    %v303 = vadd.f32 %v301, 1.0
    %v304 = vrcp.pop %v302
    %v305 = vmul.f32 1.0, %v304
    %v306 = vrcp.pop %v303
    %v307 = vmul.f32 1.0, %v306
    %vm308 = vcmask 31744
    %v309 = vsel %vm308, %v305, 0.0
    %310 = vadd.xlane.f32.xlu0 %v309
    %v311 = vpop.xlane.xlu0 %310
    %v312 = vsel %vm308, %v307, 0.0
    %313 = vadd.xlane.f32.xlu0 %v312
    %v314 = vpop.xlane.xlu0 %313
    %v315 = vrcp.pop %v311
    %v316 = vrcp.pop %v314
    %v317 = vmul.f32 %v305, %v315
    %v318 = vmul.f32 %v307, %v316
    %v319 = vmul.f32 %v317, %v317
    %v320 = vmul.f32 %v318, %v318
    %v321 = vsel %vm308, %v317, 0.0
    %v322 = vsel %vm308, %v318, 0.0
    %v323 = vadd.f32 %v321, %v322
    %v324 = vrot.slane %v323, 4
    %v325 = vadd.f32 %v323, %v324
    %v326 = vrot.slane %v325, 2
    %v327 = vadd.f32 %v325, %v326
    %v328 = vrot.slane %v327, 1
    %v329 = vadd.f32 %v327, %v328
    %v330 = vrcp.pop %v329
    %v331 = vmul.f32 %v319, %v330
    %v332 = vmul.f32 %v320, %v330
    %v333 = vsel %vm308, %v331, 0.0
    %334 = vadd.xlane.f32.xlu0 %v333
    %v335 = vpop.xlane.xlu0 %334
    %v336 = vsel %vm308, %v332, 0.0
    %337 = vadd.xlane.f32.xlu0 %v336
    %v338 = vpop.xlane.xlu0 %337
    %v339 = vrcp.pop %v335
    %v340 = vmul.f32 %v331, %v339
    %v341 = vrcp.pop %v338
    %v342 = vmul.f32 %v332, %v341
    %345 = vrot.lane.b32.xlu0 %v305, 124
    %v346 = vpop.permute.xlu0 %345
    %347 = vrot.lane.b32.xlu0 %v307, 124
    %v348 = vpop.permute.xlu0 %347
    %v351 = vsel %vm308, %v346, 0.0
    %352 = vadd.xlane.f32.xlu0 %v351
    %v353 = vpop.xlane.xlu0 %352
    %v354 = vsel %vm308, %v348, 0.0
    %355 = vadd.xlane.f32.xlu0 %v354
    %v356 = vpop.xlane.xlu0 %355
    %v357 = vrcp.pop %v353
    %v358 = vrcp.pop %v356
    %v359 = vmul.f32 %v305, %v357
    %v360 = vmul.f32 %v307, %v358
    %v361 = vmul.f32 %v359, %v359
    %v362 = vmul.f32 %v360, %v360
    %vm363 = vcmask 64544
    %v364 = vsel %vm363, %v359, 0.0
    %v365 = vsel %vm363, %v360, 0.0
    %v366 = vadd.f32 %v364, %v365
    %v367 = vrot.slane %v366, 4
    %v368 = vadd.f32 %v366, %v367
    %v369 = vrot.slane %v368, 2
    %v370 = vadd.f32 %v368, %v369
    %v371 = vrot.slane %v370, 1
    %v372 = vadd.f32 %v370, %v371
    %v373 = vrcp.pop %v372
    %v374 = vmul.f32 %v361, %v373
    %v375 = vmul.f32 %v362, %v373
    %378 = vrot.lane.b32.xlu0 %v374, 124
    %v379 = vpop.permute.xlu0 %378
    %380 = vrot.lane.b32.xlu0 %v375, 124
    %v381 = vpop.permute.xlu0 %380
    %v384 = vsel %vm308, %v379, 0.0
    %385 = vadd.xlane.f32.xlu0 %v384
    %v386 = vpop.xlane.xlu0 %385
    %v387 = vsel %vm308, %v381, 0.0
    %388 = vadd.xlane.f32.xlu0 %v387
    %v389 = vpop.xlane.xlu0 %388
    %v390 = vrcp.pop %v386
    %v391 = vmul.f32 %v374, %v390
    %v392 = vrcp.pop %v389
    %v393 = vmul.f32 %v375, %v392
    %396 = vrot.lane.b32.xlu0 %v391, 124
    %v397 = vpop.permute.xlu0 %396
    %398 = vrot.lane.b32.xlu0 %v393, 124
    %v399 = vpop.permute.xlu0 %398
    %v402 = vadd.f32 %v340, %v397
    %v403 = vadd.f32 %v342, %v399
    %v404 = vmul.f32 %v402, 0.5
    %v405 = vmul.f32 %v403, 0.5
    %v406 = vmax.f32 %v404, 1e-30
    %v407 = vmax.f32 %v405, 1e-30
    %v408 = vlog2.pop %v406
    %v409 = vmul.f32 %v408, 0.6931472
    %v410 = vlog2.pop %v407
    %v411 = vmul.f32 %v410, 0.6931472
    %v412 = vmax.f32 %v340, 1e-30
    %v413 = vmax.f32 %v342, 1e-30
    %v414 = vlog2.pop %v412
    %v415 = vmul.f32 %v414, 0.6931472
    %v416 = vlog2.pop %v413
    %v417 = vmul.f32 %v416, 0.6931472
    %v418 = vsub.f32 %v415, %v409
    %v419 = vsub.f32 %v417, %v411
    %v420 = vmul.f32 %v340, %v418
    %v421 = vmul.f32 %v342, %v419
    %v422 = vsel %vm308, %v420, 0.0
    %v423 = vsel %vm308, %v421, 0.0
    %v424 = vadd.f32 %v422, %v423
    %425 = vadd.xlane.f32.xlu0 %v424
    %v426 = vpop.xlane.xlu0 %425
    %v427 = vrot.slane %v426, 4
    %v428 = vadd.f32 %v426, %v427
    %v429 = vrot.slane %v428, 2
    %v430 = vadd.f32 %v428, %v429
    %v431 = vrot.slane %v430, 1
    %v432 = vadd.f32 %v430, %v431
    %s433 = vtos %v432
    %v434 = vmax.f32 %v391, 1e-30
    %v435 = vmax.f32 %v393, 1e-30
    %v436 = vlog2.pop %v434
    %v437 = vmul.f32 %v436, 0.6931472
    %v438 = vlog2.pop %v435
    %v439 = vmul.f32 %v438, 0.6931472
    %442 = vrot.lane.b32.xlu0 %v409, 4
    %v443 = vpop.permute.xlu0 %442
    %444 = vrot.lane.b32.xlu0 %v411, 4
    %v445 = vpop.permute.xlu0 %444
    %v448 = vsub.f32 %v437, %v443
    %v449 = vsub.f32 %v439, %v445
    %v450 = vmul.f32 %v391, %v448
    %v451 = vmul.f32 %v393, %v449
    %454 = vrot.lane.b32.xlu0 %v450, 124
    %v455 = vpop.permute.xlu0 %454
    %456 = vrot.lane.b32.xlu0 %v451, 124
    %v457 = vpop.permute.xlu0 %456
    %v460 = vsel %vm308, %v455, 0.0
    %v461 = vsel %vm308, %v457, 0.0
    %v462 = vadd.f32 %v460, %v461
    %463 = vadd.xlane.f32.xlu0 %v462
    %v464 = vpop.xlane.xlu0 %463
    %v465 = vrot.slane %v464, 4
    %v466 = vadd.f32 %v464, %v465
    %v467 = vrot.slane %v466, 2
    %v468 = vadd.f32 %v466, %v467
    %v469 = vrot.slane %v468, 1
    %v470 = vadd.f32 %v468, %v469
    %s471 = vtos %v470
    %s472 = sadd.f32 %s433, %s471
    %s473 = smul.f32 %s472, 0.03125
    %s474 = scalar_lea.smem [#allocation2], 0
    %475 = sst [smem:[%s474]] %s473
    // Predicated region
    $region10: #{tpu_custom_call.1} parent=1 // pred_check
      _
    $region11: #{tpu_custom_call.1} parent=1 // pred_check_branch
      %477 = sbr.rel (0) target = $region13
    $region12: #{tpu_custom_call.1} parent=1 // pred_region
      %s479 = ssub.s32 16, 16
      %480 = vsyncadd [#allocation3], %s479
      %483 = dma.smem_to_hbm [#allocation2], 16, %s2, [#allocation3]
    $region13: #{tpu_custom_call.1} parent=1 // pred_fallthru
      _
    // Predicated region
    $region14: #{tpu_custom_call.1} parent=1 // pred_check
      _
    $region15: #{tpu_custom_call.1} parent=1 // pred_check_branch
      %485 = sbr.rel (0) target = $region17
    $region16: #{tpu_custom_call.1} parent=1 // pred_region
      %486 = dma.done [#allocation3], 16
    $region17: #{tpu_custom_call.1} parent=1 // pred_fallthru
      _
    %487 = sfence
    %488 = vsyncpa [#allocation3], 1

</llo_original>
